<compile_context>
chip_gen: v7x
topology: tpu7x:2x2x1
jax: 0.10.0
libtpu: 0.0.40
codegen_flags: <defaults>
</compile_context>

<pallas_src>
import functools

import numpy as np
import jax
import jax.numpy as jnp
from jax import lax
from jax.experimental import pallas as pl
from jax.experimental.pallas import tpu as pltpu


LANE = 128                 # TPU lane width
TM = 256                   # output-pixel rows per grid step (fills 256-wide MXU M)
COMPUTE_DTYPE = jnp.bfloat16


def _round_up(x, m):
    return ((x + m - 1) // m) * m


def _mixconv_channel_split(in_ch, out_ch, k, method="equal_params"):
    """Replicates MixConv2d.__init__ channel-split logic."""
    groups = len(k)
    if method == "equal_ch":
        i = np.floor(np.linspace(0, groups - 1e-6, out_ch))
        ch = [int((i == g).sum()) for g in range(groups)]
    else:
        b = [out_ch] + [0] * groups
        a = np.eye(groups + 1, groups, k=-1)
        a -= np.roll(a, 1, axis=1)
        a *= np.array(k) ** 2
        a[0] = 1
        ch = np.linalg.lstsq(a, b, rcond=None)[0].round().astype(int)
    return [int(c) for c in ch]


def pack_mixconv_params(weights, biases, k):
    """Merge per-branch OIHW weights/biases into one im2col weight matrix.

    All branches have stride=1, dilation=1, odd k and "same" padding, so each
    branch kernel is zero-padded & centered into a Kmax x Kmax kernel.  The
    contraction order is (cin, dy, dx), matching the output-channel ordering
    of lax.conv_general_dilated_patches.

    Returns:
      packed_w: (Cin*Kmax*Kmax, Cout_pad) bf16
      packed_b: (1, Cout_pad)             f32
      out_ch, kmax
    Done once at init time (host side), NOT per forward call.
    """
    assert all(kg % 2 == 1 for kg in k), \
        "zero-pad-to-Kmax merge assumes odd kernel sizes with 'same' padding"
    kmax = max(k)
    in_ch = int(weights[0].shape[1])
    out_ch = sum(int(w.shape[0]) for w in weights)
    cout_pad = _round_up(out_ch, LANE)
    if cout_pad > LANE:
        # For Cout > 128, pad N to 256-multiples so the v6e/v7x MXU N dim fills.
        cout_pad = _round_up(cout_pad, 2 * LANE)

    big_w = np.zeros((in_ch, kmax, kmax, cout_pad), np.float32)
    big_b = np.zeros((cout_pad,), np.float32)
    co = 0
    for w_g, b_g, kg in zip(weights, biases, k):
        off = (kmax - kg) // 2
        ng = int(w_g.shape[0])
        w_ihwo = np.transpose(np.asarray(w_g), (1, 2, 3, 0))   # OIHW -> IHWO
        big_w[:, off:off + kg, off:off + kg, co:co + ng] = w_ihwo
        big_b[co:co + ng] = np.asarray(b_g)
        co += ng

    packed_w = jnp.asarray(big_w.reshape(in_ch * kmax * kmax, cout_pad),
                           COMPUTE_DTYPE)
    packed_b = jnp.asarray(big_b.reshape(1, cout_pad), jnp.float32)
    return packed_w, packed_b, out_ch, kmax


def _matmul_bias_kernel(p_ref, w_ref, b_ref, o_ref):
    # p_ref: (TM, Kc)        bf16 im2col patches for TM output pixels
    # w_ref: (Kc, Cout_pad)  bf16 merged weight (all branches)
    # b_ref: (1, Cout_pad)   f32  merged bias (zeros in padded channels)
    # o_ref: (TM, Cout_pad)  f32  output pixels for this tile
    acc = jnp.dot(p_ref[...], w_ref[...], preferred_element_type=jnp.float32)
    o_ref[...] = (acc + b_ref[...]).astype(o_ref.dtype)


def _vmem_limit_bytes():
    """Generation-dependent scoped-VMEM limit (64 MiB v5e/v6e, 32 MiB v7x)."""
    default = 64 * 1024 * 1024
    try:
        cap = getattr(pltpu.get_tpu_info(), "vmem_capacity_bytes", None)
    except Exception:
        cap = None
    if not cap:
        return default
    return int(min(int(cap) // 2, default))


@functools.partial(jax.jit, static_argnames=("out_ch", "kmax"))
def mixconv2d_forward(x_nchw, packed_w, packed_b, *, out_ch, kmax):
    """MixConv2d forward. x_nchw: (B, Cin, H, W) -> (B, out_ch, H, W)."""
    B, cin, H, W = x_nchw.shape
    pad = (kmax - 1) // 2
    kc, cout_pad = packed_w.shape
    assert kc == cin * kmax * kmax, (kc, cin, kmax)

    # ---- layout plumbing (wrapper, not kernel) ------------------------------
    # im2col via conv_general_dilated_patches: for tiny Cin this is far cheaper
    # than rebuilding patches from K*K 4-lane fragments inside the kernel, and
    # it hands the kernel a lane-dense (M, Kc) operand.  Feature order of the
    # patches is (cin, dy, dx), matching packed_w's rows.
    x = jnp.transpose(x_nchw, (0, 2, 3, 1)).astype(COMPUTE_DTYPE)   # NHWC bf16
    patches = lax.conv_general_dilated_patches(
        x, filter_shape=(kmax, kmax), window_strides=(1, 1),
        padding=[(pad, pad), (pad, pad)],
        dimension_numbers=("NHWC", "HWIO", "NHWC"))
    # patches: (B, H, W, Cin*Kmax*Kmax)

    M = B * H * W
    m_pad = _round_up(M, TM)
    p2d = patches.reshape(M, kc)
    if m_pad != M:
        p2d = jnp.pad(p2d, ((0, m_pad - M), (0, 0)))   # zero rows -> bias only

    cost = pl.CostEstimate(
        flops=2 * m_pad * kc * cout_pad,
        transcendentals=0,
        bytes_accessed=(p2d.size * p2d.dtype.itemsize
                        + packed_w.size * packed_w.dtype.itemsize
                        + packed_b.size * 4
                        + m_pad * cout_pad * 4),
    )

    out2d = pl.pallas_call(
        _matmul_bias_kernel,
        out_shape=jax.ShapeDtypeStruct((m_pad, cout_pad), jnp.float32),
        grid=(m_pad // TM,),
        in_specs=[
            pl.BlockSpec((TM, kc), lambda i: (i, 0)),
            # Weight/bias block indices are constant -> fetched once, resident.
            pl.BlockSpec((kc, cout_pad), lambda i: (0, 0)),
            pl.BlockSpec((1, cout_pad), lambda i: (0, 0)),
        ],
        out_specs=pl.BlockSpec((TM, cout_pad), lambda i: (i, 0)),
        compiler_params=pltpu.CompilerParams(
            dimension_semantics=("parallel",),       # shard steps across TCs
            vmem_limit_bytes=_vmem_limit_bytes(),
        ),
        cost_estimate=cost,
    )(p2d, packed_w, packed_b)

    # TODO(synk): for genuinely tiny out_ch on v5e, pack (W, out_ch) into the
    # output lane dim instead of padding channels to 128 to cut writeback HBM.
    out = out2d[:M, :out_ch].reshape(B, H, W, out_ch)
    return jnp.transpose(out, (0, 3, 1, 2))            # NHWC -> NCHW


def _reference(x_nchw, weights, biases, k):
    outs = []
    for w_g, b_g, kg in zip(weights, biases, k):
        p = (kg - 1) // 2
        o = lax.conv_general_dilated(
            x_nchw, jnp.asarray(w_g), window_strides=(1, 1),
            padding=[(p, p), (p, p)],
            dimension_numbers=("NCHW", "OIHW", "NCHW"))
        outs.append(o + jnp.asarray(b_g)[None, :, None, None])
    return jnp.concatenate(outs, axis=1)


if __name__ == "__main__":
    in_ch, out_ch = 4, 8
    k = (3, 5, 7)
    B, H, W = 2, 16, 16

    ch = _mixconv_channel_split(in_ch, out_ch, k, method="equal_params")

    key = jax.random.PRNGKey(0)
    key, kx = jax.random.split(key)
    x = jax.random.normal(kx, (B, in_ch, H, W), jnp.float32)   # NCHW input

    weights, biases = [], []
    for g, kg in enumerate(k):
        key, kw, kb = jax.random.split(key, 3)
        fan_in = in_ch * kg * kg
        bound = 1.0 / np.sqrt(fan_in)
        weights.append(jax.random.uniform(
            kw, (ch[g], in_ch, kg, kg), jnp.float32, -bound, bound))
        biases.append(jax.random.uniform(
            kb, (ch[g],), jnp.float32, -bound, bound))

    # Pack parameters once (init-time), then run the jitted forward.
    packed_w, packed_b, out_ch_total, kmax = pack_mixconv_params(
        weights, biases, k)
    assert out_ch_total == out_ch, (out_ch_total, out_ch)

    out = mixconv2d_forward(x, packed_w, packed_b,
                            out_ch=out_ch_total, kmax=kmax)
    out = jax.block_until_ready(out)

    ref = jax.block_until_ready(_reference(x, weights, biases, k))
    assert out.shape == (B, out_ch, H, W), out.shape
    # bf16 MXU path vs. f32 reference -> relaxed tolerance.
    np.testing.assert_allclose(np.asarray(out), np.asarray(ref),
                               rtol=3e-2, atol=3e-2)
    print("KERNEL_OK")
</pallas_src>

<mosaic_0001>
module attributes {stable_mosaic.version = 11 : i64} {
  func.func @_matmul_bias_kernel(%arg0: i32, %arg1: memref<256x196xbf16, #tpu.memory_space<vmem>>, %arg2: memref<196x128xbf16, #tpu.memory_space<vmem>>, %arg3: memref<1x128xf32, #tpu.memory_space<vmem>>, %arg4: memref<256x128xf32, #tpu.memory_space<vmem>>) attributes {dimension_semantics = [#tpu.dimension_semantics<parallel>], iteration_bounds = array<i64: 2>, scalar_prefetch = 0 : i64, scratch_operands = 0 : i64, tpu.core_type = #tpu.core_type<tc>, window_params = [{transform_indices = @transform_0, window_bounds = array<i64: 256, 196>}, {pipeline_mode = #tpu.pipeline_mode<synchronous>, transform_indices = @transform_1, window_bounds = array<i64: 196, 128>}, {pipeline_mode = #tpu.pipeline_mode<synchronous>, transform_indices = @transform_2, window_bounds = array<i64: 1, 128>}, {transform_indices = @transform_3, window_bounds = array<i64: 256, 128>}]} {
    %c0 = arith.constant 0 : index
    %c0_0 = arith.constant 0 : index
    %0 = vector.load %arg1[%c0, %c0_0] : memref<256x196xbf16, #tpu.memory_space<vmem>>, vector<256x196xbf16>
    %c0_1 = arith.constant 0 : index
    %c0_2 = arith.constant 0 : index
    %1 = vector.load %arg2[%c0_1, %c0_2] : memref<196x128xbf16, #tpu.memory_space<vmem>>, vector<196x128xbf16>
    %cst = arith.constant dense<0.000000e+00> : vector<256x128xf32>
    %2 = tpu.matmul %0, %1, %cst {dimension_numbers = #tpu.dot_dimension_numbers<[1], [0], [0], [1], [0, 0, 1, 1], [], []>} : vector<256x196xbf16>, vector<196x128xbf16>, vector<256x128xf32> -> vector<256x128xf32>
    %c0_3 = arith.constant 0 : index
    %c0_4 = arith.constant 0 : index
    %3 = vector.load %arg3[%c0_3, %c0_4] : memref<1x128xf32, #tpu.memory_space<vmem>>, vector<1x128xf32>
    %4 = vector.broadcast %3 : vector<1x128xf32> to vector<256x128xf32>
    %5 = arith.addf %2, %4 : vector<256x128xf32>
    %c0_5 = arith.constant 0 : index
    %c0_6 = arith.constant 0 : index
    %6 = vector.load %arg4[%c0_5, %c0_6] : memref<256x128xf32, #tpu.memory_space<vmem>>, vector<256x128xf32>
    tpu.vector_store %arg4[%c0_5, %c0_6], %5 {strides = array<i32>} : memref<256x128xf32, #tpu.memory_space<vmem>>, vector<256x128xf32>,
    return
  }
  func.func @transform_0(%arg0: i32) -> (i32, i32) {
    %c0_i32 = arith.constant 0 : i32
    %c0_i32_0 = arith.constant 0 : i32
    return %arg0, %c0_i32 : i32, i32
  }
  func.func @transform_1(%arg0: i32) -> (i32, i32) {
    %c0_i32 = arith.constant 0 : i32
    %c0_i32_0 = arith.constant 0 : i32
    %c0_i32_1 = arith.constant 0 : i32
    return %c0_i32, %c0_i32_0 : i32, i32
  }
  func.func @transform_2(%arg0: i32) -> (i32, i32) {
    %c0_i32 = arith.constant 0 : i32
    %c0_i32_0 = arith.constant 0 : i32
    %c0_i32_1 = arith.constant 0 : i32
    return %c0_i32, %c0_i32_0 : i32, i32
  }
  func.func @transform_3(%arg0: i32) -> (i32, i32) {
    %c0_i32 = arith.constant 0 : i32
    %c0_i32_0 = arith.constant 0 : i32
    return %arg0, %c0_i32 : i32, i32
  }
}

</mosaic_0001>

<llo_original>
// kernel: mixconv2d_forward.1
$region0: #{mixconv2d_forward.1}
  #allocation0 [shape = 'u32[]', space=smem, size = 0x4, offset = 0x4, fixed_abs, tag = 'smem constant byte address 0x4 - core index']
  #allocation1 [shape = 'u32[144,128]{1,0:T(1,128)}', space=vmem, size = 0x12000, scoped, tag = 'internal scratch']
  %s0 = inlined_call_operand.hbm [shape: bf16[512,196], index: 0, kind: input, shape index: {}]
  %s1 = inlined_call_operand.hbm [shape: bf16[196,128], index: 1, kind: input, shape index: {}]
  %s2 = inlined_call_operand.hbm [shape: f32[1,128], index: 2, kind: input, shape index: {}]
  %s3 = inlined_call_operand.hbm [shape: f32[512,128], index: 3, kind: output, shape index: {}]
  %s4 = sld [smem:[#allocation0]]
  $region57: #{mixconv2d_forward.1} parent=0
    _
  %s6 = ssub.s32 1, %s4
  %s7 = scalar_select 0, %s6, %s4
  $region1: #{mixconv2d_forward.1} parent=0
    #allocation2 [shape = 'u8[262144]{0}', space=vmem, size = 0x40000, scoped, tag = 'input window, operand 0']
    #allocation3 [shape = 's32[2]{0}', space=sflag, size = 0x8, scoped, tag = 'scoped memory for mixconv2d_forward.1']
    #allocation4 [shape = 's32[2]{0}', space=sflag, size = 0x8, scoped, tag = 'scoped memory for mixconv2d_forward.1']
    #allocation5 [shape = 'u8[51200]{0}', space=vmem, size = 0xc800, scoped, tag = 'input window, operand 1, single buffered']
    #allocation6 [shape = 's32[1]{0}', space=sflag, size = 0x4, scoped, tag = 'scoped memory for mixconv2d_forward.1']
    #allocation7 [shape = 'u8[512]{0}', space=vmem, size = 0x400, scoped, tag = 'input window, operand 2, single buffered']
    #allocation8 [shape = 'u8[262144]{0}', space=vmem, size = 0x40000, scoped, tag = 'output window, operand 0']
    %8 = vsyncpa [#allocation3], 0
    %s9 = scalar_lea.sflag [#allocation3], 1
    %10 = vsyncpa %s9, 0
    %11 = vsyncpa [#allocation6], 0
    %12 = vsyncpa [#allocation4], 0
    %s13 = scalar_lea.sflag [#allocation4], 1
    %14 = vsyncpa %s13, 0
    loop: start=0, step=1, limit=4
    $region2: #{mixconv2d_forward.1} parent=1 // loop_pre_header
      _
    $region3: #{mixconv2d_forward.1} parent=1 // loop_header
      %s16 = sphi 0, %s20
      %p17 = scmp.ge.s32.totalorder %s16, 4
      %s26 = sphi 0, %s28
      %s29 = sphi 0, %s26
      %s30 = sphi 0, %s29
      %s46 = sphi 0, %s30
      %s50 = sphi 0, %s50
      %s52 = sphi 0, %s50
      %s53 = sphi 0, %s52
      %s67 = sphi 0, %s53
      %s71 = sphi 0, %s71
      %s73 = sphi 0, %s71
      %s74 = sphi 0, %s73
      %s88 = sphi 0, %s74
      %s94 = sphi 0, %s96
      %s97 = sphi 0, %s94
      %s98 = sphi 0, %s97
      %s114 = sphi 0, %s98
    $region4: #{mixconv2d_forward.1} parent=1 // loop_header_branch
      %19 = sbr.rel (%p17) target = $region8
    $region5: #{mixconv2d_forward.1} parent=1 // loop_body
      %s21 = ssub.s32 %s16, 1
      %s22 = ssub.s32 %s16, 2
      %s23 = sadd.s32 %s16, 1
      %s24 = ssub.s32 %s16, %s23
      %p25 = scmp.eq.s32.totalorder %s24, 0
      %s27 = sadd.s32 %s26, 1
      %s28 = scalar_select %p25, %s26, %s27
      %p31 = pneg %p25
      %p32 = scmp.eq.s32.totalorder %s16, 1
      %p33 = por %p31, %p32
      %p34 = scmp.ne.s32.totalorder %s26, %s29
      %p35 = scmp.eq.s32.totalorder %s16, 0
      %p36 = por %p34, %p35
      %p37 = scmp.ne.s32.totalorder %s26, %s29
      %p38 = scmp.eq.s32.totalorder %s21, 1
      %p39 = por %p37, %p38
      %p40 = scmp.ne.s32.totalorder %s29, %s30
      %p41 = scmp.eq.s32.totalorder %s21, 0
      %p42 = por %p40, %p41
      %p43 = scmp.ne.s32.totalorder %s29, %s30
      %p44 = scmp.eq.s32.totalorder %s22, 1
      %p45 = por %p43, %p44
      %p47 = scmp.ne.s32.totalorder %s30, %s46
      %p48 = scmp.eq.s32.totalorder %s22, 0
      %p49 = por %p47, %p48
      %s51 = sadd.s32 %s50, 1
      %p54 = scmp.eq.s32.totalorder %s16, 1
      %p55 = scmp.ne.s32.totalorder %s50, %s52
      %p56 = scmp.eq.s32.totalorder %s16, 0
      %p57 = por %p55, %p56
      %p58 = scmp.ne.s32.totalorder %s50, %s52
      %p59 = scmp.eq.s32.totalorder %s21, 1
      %p60 = por %p58, %p59
      %p61 = scmp.ne.s32.totalorder %s52, %s53
      %p62 = scmp.eq.s32.totalorder %s21, 0
      %p63 = por %p61, %p62
      %p64 = scmp.ne.s32.totalorder %s52, %s53
      %p65 = scmp.eq.s32.totalorder %s22, 1
      %p66 = por %p64, %p65
      %p68 = scmp.ne.s32.totalorder %s53, %s67
      %p69 = scmp.eq.s32.totalorder %s22, 0
      %p70 = por %p68, %p69
      %s72 = sadd.s32 %s71, 1
      %p75 = scmp.eq.s32.totalorder %s16, 1
      %p76 = scmp.ne.s32.totalorder %s71, %s73
      %p77 = scmp.eq.s32.totalorder %s16, 0
      %p78 = por %p76, %p77
      %p79 = scmp.ne.s32.totalorder %s71, %s73
      %p80 = scmp.eq.s32.totalorder %s21, 1
      %p81 = por %p79, %p80
      %p82 = scmp.ne.s32.totalorder %s73, %s74
      %p83 = scmp.eq.s32.totalorder %s21, 0
      %p84 = por %p82, %p83
      %p85 = scmp.ne.s32.totalorder %s73, %s74
      %p86 = scmp.eq.s32.totalorder %s22, 1
      %p87 = por %p85, %p86
      %p89 = scmp.ne.s32.totalorder %s74, %s88
      %p90 = scmp.eq.s32.totalorder %s22, 0
      %p91 = por %p89, %p90
      %s92 = ssub.s32 %s16, %s23
      %p93 = scmp.eq.s32.totalorder %s92, 0
      %s95 = sadd.s32 %s94, 1
      %s96 = scalar_select %p93, %s94, %s95
      %p99 = pneg %p93
      %p100 = scmp.eq.s32.totalorder %s16, 1
      %p101 = por %p99, %p100
      %p102 = scmp.ne.s32.totalorder %s94, %s97
      %p103 = scmp.eq.s32.totalorder %s16, 0
      %p104 = por %p102, %p103
      %p105 = scmp.ne.s32.totalorder %s94, %s97
      %p106 = scmp.eq.s32.totalorder %s21, 1
      %p107 = por %p105, %p106
      %p108 = scmp.ne.s32.totalorder %s97, %s98
      %p109 = scmp.eq.s32.totalorder %s21, 0
      %p110 = por %p108, %p109
      %p111 = scmp.ne.s32.totalorder %s97, %s98
      %p112 = scmp.eq.s32.totalorder %s22, 1
      %p113 = por %p111, %p112
      %p115 = scmp.ne.s32.totalorder %s98, %s114
      %p116 = scmp.eq.s32.totalorder %s22, 0
      %p117 = por %p115, %p116
      %p118 = scmp.le.s32.totalorder 1, %s16
      %p119 = scmp.lt.s32.totalorder %s16, 3
      %p120 = pnand %p118, %p119
      %p121 = pneg %p120
      // Predicated region
      $region9: #{mixconv2d_forward.1} parent=5 // pred_check
        _
      $region10: #{mixconv2d_forward.1} parent=5 // pred_check_branch
        %123 = sbr.rel (%p120) target = $region12
      $region11: #{mixconv2d_forward.1} parent=5 // pred_region
        %s124 = ssub.s32 %s16, 1
        // Predicated region
        $region13: #{mixconv2d_forward.1} parent=11 // pred_check
          %p125 = pneg %p63
        $region14: #{mixconv2d_forward.1} parent=11 // pred_check_branch
          %127 = sbr.rel (%p125) target = $region16
        $region15: #{mixconv2d_forward.1} parent=11 // pred_region
          %s129 = ssub.s32 1600, 1600
          %130 = vsyncadd [#allocation6], %s129
          %s131 = sshll.u32 [#allocation5], 4
          %s132 = int_to_ptr.vmem [resolvable:$true] %s131
          %137 = dma.hbm_to_vmem [thread:$0]  %s1, 1600, %s132, [#allocation6], 64, 64, 4
        $region16: #{mixconv2d_forward.1} parent=11 // pred_fallthru
          _
        // Predicated region
        $region17: #{mixconv2d_forward.1} parent=11 // pred_check
          %p138 = pneg %p84
        $region18: #{mixconv2d_forward.1} parent=11 // pred_check_branch
          %140 = sbr.rel (%p138) target = $region20
        $region19: #{mixconv2d_forward.1} parent=11 // pred_region
          %s142 = ssub.s32 16, 16
          %143 = vsyncadd [#allocation6], %s142
          %s145 = sshll.u32 [#allocation7], 4
          %s146 = int_to_ptr.vmem [resolvable:$true] %s145
          %148 = dma.hbm_to_vmem [thread:$0]  %s2, 16, %s146, [#allocation6]
        $region20: #{mixconv2d_forward.1} parent=11 // pred_fallthru
          _
      $region12: #{mixconv2d_forward.1} parent=5 // pred_fallthru
        _
      %p149 = scmp.lt.s32.totalorder %s16, 2
      // Predicated region
      $region21: #{mixconv2d_forward.1} parent=5 // pred_check
        %p150 = pneg %p149
      $region22: #{mixconv2d_forward.1} parent=5 // pred_check_branch
        %152 = sbr.rel (%p150) target = $region24
      $region23: #{mixconv2d_forward.1} parent=5 // pred_region
        // Predicated region
        $region25: #{mixconv2d_forward.1} parent=23 // pred_check
          %p153 = pneg %p36
        $region26: #{mixconv2d_forward.1} parent=23 // pred_check_branch
          %155 = sbr.rel (%p153) target = $region28
        $region27: #{mixconv2d_forward.1} parent=23 // pred_region
          %s156 = sand.u32 %s26, 1
          %s157 = scalar_lea.sflag [#allocation3], %s156
          %s158 = sand.u32 %s26, 1
          %s159 = smul.addr %s158, 256
          %s160 = scalar_lea.vmem [#allocation2], %s159
          %s161 = smul.u32 32, %s16
          %s163 = ssub.s32 4096, 4096
          %164 = vsyncadd %s157, %s163
          %s165 = smul.addr %s161, 2
          %s166 = smul.addr %s165, 64
          %s167 = scalar_lea.hbm %s0, %s166
          %s168 = sshll.u32 %s160, 4
          %s169 = int_to_ptr.vmem [resolvable:$true] %s168
          %174 = dma.hbm_to_vmem [thread:$0]  %s167, 4096, %s169, %s157, 128, 128, 8
        $region28: #{mixconv2d_forward.1} parent=23 // pred_fallthru
          _
      $region24: #{mixconv2d_forward.1} parent=5 // pred_fallthru
        _
      %p175 = scmp.le.s32.totalorder 1, %s16
      %p176 = scmp.lt.s32.totalorder %s16, 3
      %p177 = pnand %p175, %p176
      %p178 = pneg %p177
      // Predicated region
      $region29: #{mixconv2d_forward.1} parent=5 // pred_check
        _
      $region30: #{mixconv2d_forward.1} parent=5 // pred_check_branch
        %180 = sbr.rel (%p177) target = $region32
      $region31: #{mixconv2d_forward.1} parent=5 // pred_region
        %s181 = ssub.s32 %s16, 1
        %s182 = sand.u32 %s29, 1
        %s183 = scalar_lea.sflag [#allocation3], %s182
        %s184 = sand.u32 %s29, 1
        %s185 = smul.addr %s184, 256
        %s186 = scalar_lea.vmem [#allocation2], %s185
        // Predicated region
        $region33: #{mixconv2d_forward.1} parent=31 // pred_check
          %p187 = pneg %p42
        $region34: #{mixconv2d_forward.1} parent=31 // pred_check_branch
          %189 = sbr.rel (%p187) target = $region36
        $region35: #{mixconv2d_forward.1} parent=31 // pred_region
          %190 = dma.done %s183, 4096
        $region36: #{mixconv2d_forward.1} parent=31 // pred_fallthru
          _
        // Predicated region
        $region37: #{mixconv2d_forward.1} parent=31 // pred_check
          %p191 = pneg %p63
        $region38: #{mixconv2d_forward.1} parent=31 // pred_check_branch
          %193 = sbr.rel (%p191) target = $region40
        $region39: #{mixconv2d_forward.1} parent=31 // pred_region
          %194 = dma.done [#allocation6], 1600
        $region40: #{mixconv2d_forward.1} parent=31 // pred_fallthru
          _
        // Predicated region
        $region41: #{mixconv2d_forward.1} parent=31 // pred_check
          %p195 = pneg %p84
        $region42: #{mixconv2d_forward.1} parent=31 // pred_check_branch
          %197 = sbr.rel (%p195) target = $region44
        $region43: #{mixconv2d_forward.1} parent=31 // pred_region
          %198 = dma.done [#allocation6], 16
        $region44: #{mixconv2d_forward.1} parent=31 // pred_fallthru
          _
        %s199 = sand.u32 %s29, 1
        %s200 = scalar_lea.sflag [#allocation3], %s199
        %s201 = sand.u32 %s29, 1
        %s202 = smul.addr %s201, 256
        %s203 = scalar_lea.vmem [#allocation2], %s202
        %p204 = pneg %p42
        %p205 = pneg %p39
        %p206 = pneg %p63
        %p207 = pneg %p60
        %p208 = pneg %p84
        %p209 = pneg %p81
        %p210 = pneg %p110
        %p211 = pneg %p107
        %s212 = sand.u32 %s97, 1
        %s213 = scalar_lea.sflag [#allocation4], %s212
        %s214 = sand.u32 %s97, 1
        %s215 = smul.addr %s214, 256
        %s216 = scalar_lea.vmem [#allocation8], %s215
        %s217 = smul.u32 32, %s21
        %s218 = smul.u32 32, %s21
        %v220 = vld [vmem:[%s186] sm:$0xff]
        %v221 = vld [vmem:[%s186 + $0x8] sm:$0xff]
        %v222 = vld [vmem:[%s186 + $0x10] sm:$0xff]
        %v223 = vld [vmem:[%s186 + $0x18] sm:$0xff]
        %v224 = vld [vmem:[%s186 + $0x20] sm:$0xff]
        %v225 = vld [vmem:[%s186 + $0x28] sm:$0xff]
        %v226 = vld [vmem:[%s186 + $0x30] sm:$0xff]
        %v227 = vld [vmem:[%s186 + $0x38] sm:$0xff]
        %v228 = vld [vmem:[%s186 + $0x40] sm:$0xff]
        %v229 = vld [vmem:[%s186 + $0x48] sm:$0xff]
        %v230 = vld [vmem:[%s186 + $0x50] sm:$0xff]
        %v231 = vld [vmem:[%s186 + $0x58] sm:$0xff]
        %v232 = vld [vmem:[%s186 + $0x60] sm:$0xff]
        %v233 = vld [vmem:[%s186 + $0x68] sm:$0xff]
        %v234 = vld [vmem:[%s186 + $0x70] sm:$0xff]
        %v235 = vld [vmem:[%s186 + $0x78] sm:$0xff]
        %v236 = vld [vmem:[%s186 + $0x80] sm:$0xff]
        %v237 = vld [vmem:[%s186 + $0x88] sm:$0xff]
        %v238 = vld [vmem:[%s186 + $0x90] sm:$0xff]
        %v239 = vld [vmem:[%s186 + $0x98] sm:$0xff]
        %v240 = vld [vmem:[%s186 + $0xa0] sm:$0xff]
        %v241 = vld [vmem:[%s186 + $0xa8] sm:$0xff]
        %v242 = vld [vmem:[%s186 + $0xb0] sm:$0xff]
        %v243 = vld [vmem:[%s186 + $0xb8] sm:$0xff]
        %v244 = vld [vmem:[%s186 + $0xc0] sm:$0xff]
        %v245 = vld [vmem:[%s186 + $0xc8] sm:$0xff]
        %v246 = vld [vmem:[%s186 + $0xd0] sm:$0xff]
        %v247 = vld [vmem:[%s186 + $0xd8] sm:$0xff]
        %v248 = vld [vmem:[%s186 + $0xe0] sm:$0xff]
        %v249 = vld [vmem:[%s186 + $0xe8] sm:$0xff]
        %v250 = vld [vmem:[%s186 + $0xf0] sm:$0xff]
        %v251 = vld [vmem:[%s186 + $0xf8] sm:$0xff]
        %v252 = vld [vmem:[#allocation5] sm:$0xf]
        %v253 = vld [vmem:[#allocation5 + $0x4] sm:$0xf]
        %v254 = vld [vmem:[#allocation5 + $0x8] sm:$0xf]
        %v255 = vld [vmem:[#allocation5 + $0xc] sm:$0xf]
        %v256 = vld [vmem:[#allocation5 + $0x10] sm:$0xf]
        %v257 = vld [vmem:[#allocation5 + $0x14] sm:$0xf]
        %v258 = vld [vmem:[#allocation5 + $0x18] sm:$0xf]
        %v259 = vld [vmem:[#allocation5 + $0x1c] sm:$0xf]
        %v260 = vld [vmem:[#allocation5 + $0x20] sm:$0xf]
        %v261 = vld [vmem:[#allocation5 + $0x24] sm:$0xf]
        %v262 = vld [vmem:[#allocation5 + $0x28] sm:$0xf]
        %v263 = vld [vmem:[#allocation5 + $0x2c] sm:$0xf]
        %v264 = vld [vmem:[#allocation5 + $0x30] sm:$0xf]
        %v265 = vld [vmem:[#allocation5 + $0x34] sm:$0xf]
        %v266 = vld [vmem:[#allocation5 + $0x38] sm:$0xf]
        %v267 = vld [vmem:[#allocation5 + $0x3c] sm:$0xf]
        %v268 = vld [vmem:[#allocation5 + $0x40] sm:$0xf]
        %v269 = vld [vmem:[#allocation5 + $0x44] sm:$0xf]
        %v270 = vld [vmem:[#allocation5 + $0x48] sm:$0xf]
        %v271 = vld [vmem:[#allocation5 + $0x4c] sm:$0xf]
        %v272 = vld [vmem:[#allocation5 + $0x50] sm:$0xf]
        %v273 = vld [vmem:[#allocation5 + $0x54] sm:$0xf]
        %v274 = vld [vmem:[#allocation5 + $0x58] sm:$0xf]
        %v275 = vld [vmem:[#allocation5 + $0x5c] sm:$0xf]
        %v276 = vld [vmem:[#allocation5 + $0x60] sm:$0x3]
        %v277 = vld [vmem:[#allocation7] sm:$0x1]
        %v279 = vlaneseq
        %v280 = vshrl.u32 %v279, 7
        %v281 = vsub.s32 0, %v280
        %v282 = vrot.slane %v277, %v281
        %v316 = vunpack.c.l.b16 %v220
        %v317 = vunpack.c.h.b16 %v220
        %v318 = vunpack.c.l.b16 %v221
        %v319 = vunpack.c.h.b16 %v221
        %v320 = vunpack.c.l.b16 %v222
        %v321 = vunpack.c.h.b16 %v222
        %v322 = vunpack.c.l.b16 %v223
        %v323 = vunpack.c.h.b16 %v223
        %v324 = vunpack.c.l.b16 %v224
        %v325 = vunpack.c.h.b16 %v224
        %v326 = vunpack.c.l.b16 %v225
        %v327 = vunpack.c.h.b16 %v225
        %v328 = vunpack.c.l.b16 %v226
        %v329 = vunpack.c.h.b16 %v226
        %v330 = vunpack.c.l.b16 %v227
        %v331 = vunpack.c.h.b16 %v227
        %v332 = vunpack.c.l.b16 %v228
        %v333 = vunpack.c.h.b16 %v228
        %v334 = vunpack.c.l.b16 %v229
        %v335 = vunpack.c.h.b16 %v229
        %v336 = vunpack.c.l.b16 %v230
        %v337 = vunpack.c.h.b16 %v230
        %v338 = vunpack.c.l.b16 %v231
        %v339 = vunpack.c.h.b16 %v231
        %v340 = vunpack.c.l.b16 %v232
        %v341 = vunpack.c.h.b16 %v232
        %v342 = vunpack.c.l.b16 %v233
        %v343 = vunpack.c.h.b16 %v233
        %v344 = vunpack.c.l.b16 %v234
        %v345 = vunpack.c.h.b16 %v234
        %v346 = vunpack.c.l.b16 %v235
        %v347 = vunpack.c.h.b16 %v235
        %v348 = vunpack.c.l.b16 %v236
        %v349 = vunpack.c.h.b16 %v236
        %v350 = vunpack.c.l.b16 %v237
        %v351 = vunpack.c.h.b16 %v237
        %v352 = vunpack.c.l.b16 %v238
        %v353 = vunpack.c.h.b16 %v238
        %v354 = vunpack.c.l.b16 %v239
        %v355 = vunpack.c.h.b16 %v239
        %v356 = vunpack.c.l.b16 %v240
        %v357 = vunpack.c.h.b16 %v240
        %v358 = vunpack.c.l.b16 %v241
        %v359 = vunpack.c.h.b16 %v241
        %v360 = vunpack.c.l.b16 %v242
        %v361 = vunpack.c.h.b16 %v242
        %v362 = vunpack.c.l.b16 %v243
        %v363 = vunpack.c.h.b16 %v243
        %v364 = vunpack.c.l.b16 %v244
        %v365 = vunpack.c.h.b16 %v244
        %v366 = vunpack.c.l.b16 %v245
        %v367 = vunpack.c.h.b16 %v245
        %v368 = vunpack.c.l.b16 %v246
        %v369 = vunpack.c.h.b16 %v246
        %v370 = vunpack.c.l.b16 %v247
        %v371 = vunpack.c.h.b16 %v247
        %v372 = vunpack.c.l.b16 %v248
        %v373 = vunpack.c.h.b16 %v248
        %v374 = vunpack.c.l.b16 %v249
        %v375 = vunpack.c.h.b16 %v249
        %v376 = vunpack.c.l.b16 %v250
        %v377 = vunpack.c.h.b16 %v250
        %v378 = vunpack.c.l.b16 %v251
        %v379 = vunpack.c.h.b16 %v251
        %v380 = vpack.c.b16 %v318, %v316
        %v381 = vpack.c.b16 %v319, %v317
        %v382 = vpack.c.b16 %v322, %v320
        %v383 = vpack.c.b16 %v323, %v321
        %v384 = vpack.c.b16 %v326, %v324
        %v385 = vpack.c.b16 %v327, %v325
        %v386 = vpack.c.b16 %v330, %v328
        %v387 = vpack.c.b16 %v331, %v329
        %v388 = vpack.c.b16 %v334, %v332
        %v389 = vpack.c.b16 %v335, %v333
        %v390 = vpack.c.b16 %v338, %v336
        %v391 = vpack.c.b16 %v339, %v337
        %v392 = vpack.c.b16 %v342, %v340
        %v393 = vpack.c.b16 %v343, %v341
        %v394 = vpack.c.b16 %v346, %v344
        %v395 = vpack.c.b16 %v347, %v345
        %v396 = vpack.c.b16 %v350, %v348
        %v397 = vpack.c.b16 %v351, %v349
        %v398 = vpack.c.b16 %v354, %v352
        %v399 = vpack.c.b16 %v355, %v353
        %v400 = vpack.c.b16 %v358, %v356
        %v401 = vpack.c.b16 %v359, %v357
        %v402 = vpack.c.b16 %v362, %v360
        %v403 = vpack.c.b16 %v363, %v361
        %v404 = vpack.c.b16 %v366, %v364
        %v405 = vpack.c.b16 %v367, %v365
        %v406 = vpack.c.b16 %v370, %v368
        %v407 = vpack.c.b16 %v371, %v369
        %v408 = vpack.c.b16 %v374, %v372
        %v409 = vpack.c.b16 %v375, %v373
        %v410 = vpack.c.b16 %v378, %v376
        %v411 = vpack.c.b16 %v379, %v377
        %v453 = vunpack.c.l.b16 %v252
        %v454 = vunpack.c.l.b16 %v253
        %v455 = vunpack.c.l.b16 %v254
        %v456 = vunpack.c.l.b16 %v255
        %v457 = vunpack.c.l.b16 %v256
        %v458 = vunpack.c.l.b16 %v257
        %v459 = vunpack.c.l.b16 %v258
        %v460 = vunpack.c.l.b16 %v259
        %v461 = vunpack.c.l.b16 %v260
        %v462 = vunpack.c.l.b16 %v261
        %v463 = vunpack.c.l.b16 %v262
        %v464 = vunpack.c.l.b16 %v263
        %v465 = vunpack.c.l.b16 %v264
        %v466 = vunpack.c.l.b16 %v265
        %v467 = vunpack.c.l.b16 %v266
        %v468 = vunpack.c.l.b16 %v267
        %v469 = vunpack.c.l.b16 %v268
        %v470 = vunpack.c.l.b16 %v269
        %v471 = vunpack.c.l.b16 %v270
        %v472 = vunpack.c.l.b16 %v271
        %v473 = vunpack.c.l.b16 %v272
        %v474 = vunpack.c.l.b16 %v273
        %v475 = vunpack.c.l.b16 %v274
        %v476 = vunpack.c.l.b16 %v275
        %v477 = vunpack.c.l.b16 %v276
        %v478 = vpack.c.b16 %v454, %v453
        %v479 = vpack.c.b16 %v456, %v455
        %v480 = vpack.c.b16 %v458, %v457
        %v481 = vpack.c.b16 %v460, %v459
        %v482 = vpack.c.b16 %v462, %v461
        %v483 = vpack.c.b16 %v464, %v463
        %v484 = vpack.c.b16 %v466, %v465
        %v485 = vpack.c.b16 %v468, %v467
        %v486 = vpack.c.b16 %v470, %v469
        %v487 = vpack.c.b16 %v472, %v471
        %v488 = vpack.c.b16 %v474, %v473
        %v489 = vpack.c.b16 %v476, %v475
        %v490 = vpack.c.b16 %v477, %v477
        %vm503 = vcmask 556032
        %v505 = vsel %vm503, %v381, 0
        %v508 = vsel %vm503, %v383, 0
        %v511 = vsel %vm503, %v385, 0
        %v514 = vsel %vm503, %v387, 0
        %v517 = vsel %vm503, %v389, 0
        %v520 = vsel %vm503, %v391, 0
        %v523 = vsel %vm503, %v393, 0
        %v526 = vsel %vm503, %v395, 0
        %v529 = vsel %vm503, %v397, 0
        %v532 = vsel %vm503, %v399, 0
        %v535 = vsel %vm503, %v401, 0
        %v538 = vsel %vm503, %v403, 0
        %v541 = vsel %vm503, %v405, 0
        %v544 = vsel %vm503, %v407, 0
        %v547 = vsel %vm503, %v409, 0
        %v550 = vsel %vm503, %v411, 0
        %vm552 = vcmask 1041408
        %v554 = vsel %vm552, %v490, 0
        %556 = vmatprep.subr.bf16.mxu0 0
        %557 = vmatpush1.bf16.msra.mxu0 %v478
        %558 = vmatprep.subr.bf16.mxu0 0
        %559 = vmatpush1.bf16.msra.mxu0 %v479
        %560 = vmatprep.subr.bf16.mxu0 0
        %561 = vmatpush1.bf16.msra.mxu0 %v480
        %562 = vmatprep.subr.bf16.mxu0 0
        %563 = vmatpush1.bf16.msra.mxu0 %v481
        %564 = vmatprep.subr.bf16.mxu0 0
        %565 = vmatpush1.bf16.msra.mxu0 %v482
        %566 = vmatprep.subr.bf16.mxu0 0
        %567 = vmatpush1.bf16.msra.mxu0 %v483
        %568 = vmatprep.subr.bf16.mxu0 0
        %569 = vmatpush1.bf16.msra.mxu0 %v484
        %570 = vmatprep.subr.bf16.mxu0 0
        %571 = vmatpush1.bf16.msra.mxu0 %v485
        %572 = vmatprep.subr.bf16.mxu0 0
        %573 = vmatpush1.bf16.msra.mxu0 %v486
        %574 = vmatprep.subr.bf16.mxu0 0
        %575 = vmatpush1.bf16.msra.mxu0 %v487
        %576 = vmatprep.subr.bf16.mxu0 0
        %577 = vmatpush1.bf16.msra.mxu0 %v488
        %578 = vmatprep.subr.bf16.mxu0 0
        %579 = vmatpush1.bf16.msra.mxu0 %v489
        %580 = vmatprep.subr.bf16.mxu0 0
        %581 = vmatpush1.bf16.msra.mxu0 %v554
        %582 = vmatprep.subr.bf16.mxu0 0
        %583 = vmatpush1.bf16.msra.mxu0 0
        %584 = vmatprep.subr.bf16.mxu0 0
        %585 = vmatpush1.bf16.msra.mxu0 0
        %586 = vmatprep.subr.bf16.mxu0 0
        %587 = vmatpush1.bf16.msra.mxu0 0
        %588 = vmatprep.mubr.bf16.mxu0 %v505
        %589 = vmatmul.mubr.bf16.gmra.mrb[0].mxu0 %v380
        %v590 = vpop.f32.mrb[0].mxu0
        %v591 = vadd.f32 %v282, %v590
        %v592 = vpop.f32.mrb[0].mxu0
        %v593 = vpop.f32.mrb[0].mxu0
        %v594 = vadd.f32 %v282, %v593
        %v595 = vpop.f32.mrb[0].mxu0
        %596 = vmatprep.mubr.bf16.mxu0 %v508
        %597 = vmatmul.mubr.bf16.gmra.mrb[0].mxu0 %v382
        %v598 = vpop.f32.mrb[0].mxu0
        %v599 = vadd.f32 %v282, %v598
        %v600 = vpop.f32.mrb[0].mxu0
        %v601 = vpop.f32.mrb[0].mxu0
        %v602 = vadd.f32 %v282, %v601
        %v603 = vpop.f32.mrb[0].mxu0
        %604 = vmatprep.mubr.bf16.mxu0 %v511
        %605 = vmatmul.mubr.bf16.gmra.mrb[0].mxu0 %v384
        %v606 = vpop.f32.mrb[0].mxu0
        %v607 = vadd.f32 %v282, %v606
        %v608 = vpop.f32.mrb[0].mxu0
        %v609 = vpop.f32.mrb[0].mxu0
        %v610 = vadd.f32 %v282, %v609
        %v611 = vpop.f32.mrb[0].mxu0
        %612 = vmatprep.mubr.bf16.mxu0 %v514
        %613 = vmatmul.mubr.bf16.gmra.mrb[0].mxu0 %v386
        %v614 = vpop.f32.mrb[0].mxu0
        %v615 = vadd.f32 %v282, %v614
        %v616 = vpop.f32.mrb[0].mxu0
        %v617 = vpop.f32.mrb[0].mxu0
        %v618 = vadd.f32 %v282, %v617
        %v619 = vpop.f32.mrb[0].mxu0
        %620 = vmatprep.mubr.bf16.mxu0 %v517
        %621 = vmatmul.mubr.bf16.gmra.mrb[0].mxu0 %v388
        %v622 = vpop.f32.mrb[0].mxu0
        %v623 = vadd.f32 %v282, %v622
        %v624 = vpop.f32.mrb[0].mxu0
        %v625 = vpop.f32.mrb[0].mxu0
        %v626 = vadd.f32 %v282, %v625
        %v627 = vpop.f32.mrb[0].mxu0
        %628 = vmatprep.mubr.bf16.mxu0 %v520
        %629 = vmatmul.mubr.bf16.gmra.mrb[0].mxu0 %v390
        %v630 = vpop.f32.mrb[0].mxu0
        %v631 = vadd.f32 %v282, %v630
        %v632 = vpop.f32.mrb[0].mxu0
        %v633 = vpop.f32.mrb[0].mxu0
        %v634 = vadd.f32 %v282, %v633
        %v635 = vpop.f32.mrb[0].mxu0
        %636 = vmatprep.mubr.bf16.mxu0 %v523
        %637 = vmatmul.mubr.bf16.gmra.mrb[0].mxu0 %v392
        %v638 = vpop.f32.mrb[0].mxu0
        %v639 = vadd.f32 %v282, %v638
        %v640 = vpop.f32.mrb[0].mxu0
        %v641 = vpop.f32.mrb[0].mxu0
        %v642 = vadd.f32 %v282, %v641
        %v643 = vpop.f32.mrb[0].mxu0
        %644 = vmatprep.mubr.bf16.mxu0 %v526
        %645 = vmatmul.mubr.bf16.gmra.mrb[0].mxu0 %v394
        %v646 = vpop.f32.mrb[0].mxu0
        %v647 = vadd.f32 %v282, %v646
        %v648 = vpop.f32.mrb[0].mxu0
        %v649 = vpop.f32.mrb[0].mxu0
        %v650 = vadd.f32 %v282, %v649
        %v651 = vpop.f32.mrb[0].mxu0
        %652 = vmatprep.mubr.bf16.mxu0 %v529
        %653 = vmatmul.mubr.bf16.gmra.mrb[0].mxu0 %v396
        %v654 = vpop.f32.mrb[0].mxu0
        %v655 = vadd.f32 %v282, %v654
        %v656 = vpop.f32.mrb[0].mxu0
        %v657 = vpop.f32.mrb[0].mxu0
        %v658 = vadd.f32 %v282, %v657
        %v659 = vpop.f32.mrb[0].mxu0
        %660 = vmatprep.mubr.bf16.mxu0 %v532
        %661 = vmatmul.mubr.bf16.gmra.mrb[0].mxu0 %v398
        %v662 = vpop.f32.mrb[0].mxu0
        %v663 = vadd.f32 %v282, %v662
        %v664 = vpop.f32.mrb[0].mxu0
        %v665 = vpop.f32.mrb[0].mxu0
        %v666 = vadd.f32 %v282, %v665
        %v667 = vpop.f32.mrb[0].mxu0
        %668 = vmatprep.mubr.bf16.mxu0 %v535
        %669 = vmatmul.mubr.bf16.gmra.mrb[0].mxu0 %v400
        %v670 = vpop.f32.mrb[0].mxu0
        %v671 = vadd.f32 %v282, %v670
        %v672 = vpop.f32.mrb[0].mxu0
        %v673 = vpop.f32.mrb[0].mxu0
        %v674 = vadd.f32 %v282, %v673
        %v675 = vpop.f32.mrb[0].mxu0
        %676 = vmatprep.mubr.bf16.mxu0 %v538
        %677 = vmatmul.mubr.bf16.gmra.mrb[0].mxu0 %v402
        %v678 = vpop.f32.mrb[0].mxu0
        %v679 = vadd.f32 %v282, %v678
        %v680 = vpop.f32.mrb[0].mxu0
        %v681 = vpop.f32.mrb[0].mxu0
        %v682 = vadd.f32 %v282, %v681
        %v683 = vpop.f32.mrb[0].mxu0
        %684 = vmatprep.mubr.bf16.mxu0 %v541
        %685 = vmatmul.mubr.bf16.gmra.mrb[0].mxu0 %v404
        %v686 = vpop.f32.mrb[0].mxu0
        %v687 = vadd.f32 %v282, %v686
        %v688 = vpop.f32.mrb[0].mxu0
        %v689 = vpop.f32.mrb[0].mxu0
        %v690 = vadd.f32 %v282, %v689
        %v691 = vpop.f32.mrb[0].mxu0
        %692 = vmatprep.mubr.bf16.mxu0 %v544
        %693 = vmatmul.mubr.bf16.gmra.mrb[0].mxu0 %v406
        %v694 = vpop.f32.mrb[0].mxu0
        %v695 = vadd.f32 %v282, %v694
        %v696 = vpop.f32.mrb[0].mxu0
        %v697 = vpop.f32.mrb[0].mxu0
        %v698 = vadd.f32 %v282, %v697
        %v699 = vpop.f32.mrb[0].mxu0
        %700 = vmatprep.mubr.bf16.mxu0 %v547
        %701 = vmatmul.mubr.bf16.gmra.mrb[0].mxu0 %v408
        %v702 = vpop.f32.mrb[0].mxu0
        %v703 = vadd.f32 %v282, %v702
        %v704 = vpop.f32.mrb[0].mxu0
        %v705 = vpop.f32.mrb[0].mxu0
        %v706 = vadd.f32 %v282, %v705
        %v707 = vpop.f32.mrb[0].mxu0
        %708 = vmatprep.mubr.bf16.mxu0 %v550
        %709 = vmatmul.mubr.bf16.gmra.mrb[0].mxu0 %v410
        %v710 = vpop.f32.mrb[0].mxu0
        %v711 = vadd.f32 %v282, %v710
        %v712 = vpop.f32.mrb[0].mxu0
        %v713 = vpop.f32.mrb[0].mxu0
        %v714 = vadd.f32 %v282, %v713
        %v715 = vpop.f32.mrb[0].mxu0
        %716 = vdwg.mxu0
        %717 = vst [vmem:[%s216] sm:$0xff] %v591
        %718 = vst [vmem:[%s216 + $0x8] sm:$0xff] %v594
        %719 = vst [vmem:[%s216 + $0x10] sm:$0xff] %v599
        %720 = vst [vmem:[%s216 + $0x18] sm:$0xff] %v602
        %721 = vst [vmem:[%s216 + $0x20] sm:$0xff] %v607
        %722 = vst [vmem:[%s216 + $0x28] sm:$0xff] %v610
        %723 = vst [vmem:[%s216 + $0x30] sm:$0xff] %v615
        %724 = vst [vmem:[%s216 + $0x38] sm:$0xff] %v618
        %725 = vst [vmem:[%s216 + $0x40] sm:$0xff] %v623
        %726 = vst [vmem:[%s216 + $0x48] sm:$0xff] %v626
        %727 = vst [vmem:[%s216 + $0x50] sm:$0xff] %v631
        %728 = vst [vmem:[%s216 + $0x58] sm:$0xff] %v634
        %729 = vst [vmem:[%s216 + $0x60] sm:$0xff] %v639
        %730 = vst [vmem:[%s216 + $0x68] sm:$0xff] %v642
        %731 = vst [vmem:[%s216 + $0x70] sm:$0xff] %v647
        %732 = vst [vmem:[%s216 + $0x78] sm:$0xff] %v650
        %733 = vst [vmem:[%s216 + $0x80] sm:$0xff] %v655
        %734 = vst [vmem:[%s216 + $0x88] sm:$0xff] %v658
        %735 = vst [vmem:[%s216 + $0x90] sm:$0xff] %v663
        %736 = vst [vmem:[%s216 + $0x98] sm:$0xff] %v666
        %737 = vst [vmem:[%s216 + $0xa0] sm:$0xff] %v671
        %738 = vst [vmem:[%s216 + $0xa8] sm:$0xff] %v674
        %739 = vst [vmem:[%s216 + $0xb0] sm:$0xff] %v679
        %740 = vst [vmem:[%s216 + $0xb8] sm:$0xff] %v682
        %741 = vst [vmem:[%s216 + $0xc0] sm:$0xff] %v687
        %742 = vst [vmem:[%s216 + $0xc8] sm:$0xff] %v690
        %743 = vst [vmem:[%s216 + $0xd0] sm:$0xff] %v695
        %744 = vst [vmem:[%s216 + $0xd8] sm:$0xff] %v698
        %745 = vst [vmem:[%s216 + $0xe0] sm:$0xff] %v703
        %746 = vst [vmem:[%s216 + $0xe8] sm:$0xff] %v706
        %747 = vst [vmem:[%s216 + $0xf0] sm:$0xff] %v711
        %748 = vst [vmem:[%s216 + $0xf8] sm:$0xff] %v714
        %s749 = sand.u32 %s97, 1
        %s750 = scalar_lea.sflag [#allocation4], %s749
        %s751 = sand.u32 %s97, 1
        %s752 = smul.addr %s751, 256
        %s753 = scalar_lea.vmem [#allocation8], %s752
        // Predicated region
        $region45: #{mixconv2d_forward.1} parent=31 // pred_check
          %p754 = pneg %p107
        $region46: #{mixconv2d_forward.1} parent=31 // pred_check_branch
          %756 = sbr.rel (%p754) target = $region48
        $region47: #{mixconv2d_forward.1} parent=31 // pred_region
          %s757 = smul.u32 32, %s21
          %s759 = ssub.s32 4096, 4096
          %760 = vsyncadd %s750, %s759
          %s761 = smul.addr %s757, 128
          %s762 = scalar_lea.hbm %s3, %s761
          %s763 = sshll.u32 %s753, 4
          %s764 = int_to_ptr.vmem [resolvable:$true] %s763
          %769 = dma.vmem_to_hbm [thread:$0]  %s764, 4096, %s762, %s750, 128, 128, 8
        $region48: #{mixconv2d_forward.1} parent=31 // pred_fallthru
          _
      $region32: #{mixconv2d_forward.1} parent=5 // pred_fallthru
        _
      %p770 = scmp.le.s32.totalorder 2, %s16
      // Predicated region
      $region49: #{mixconv2d_forward.1} parent=5 // pred_check
        %p771 = pneg %p770
      $region50: #{mixconv2d_forward.1} parent=5 // pred_check_branch
        %773 = sbr.rel (%p771) target = $region52
      $region51: #{mixconv2d_forward.1} parent=5 // pred_region
        %s774 = ssub.s32 %s16, 2
        // Predicated region
        $region53: #{mixconv2d_forward.1} parent=51 // pred_check
          %p775 = pneg %p113
        $region54: #{mixconv2d_forward.1} parent=51 // pred_check_branch
          %777 = sbr.rel (%p775) target = $region56
        $region55: #{mixconv2d_forward.1} parent=51 // pred_region
          %s778 = sand.u32 %s98, 1
          %s779 = scalar_lea.sflag [#allocation4], %s778
          %s780 = sand.u32 %s98, 1
          %s781 = smul.addr %s780, 256
          %s782 = scalar_lea.vmem [#allocation8], %s781
          %783 = dma.done %s779, 4096
        $region56: #{mixconv2d_forward.1} parent=51 // pred_fallthru
          _
      $region52: #{mixconv2d_forward.1} parent=5 // pred_fallthru
        _
    $region6: #{mixconv2d_forward.1} parent=1 // loop_footer
      %s20 = sadd.s32 1, %s16
    $region7: #{mixconv2d_forward.1} parent=1 // loop_footer_branch
      %15 = sbr.rel target = $region3
    $region8: #{mixconv2d_forward.1} parent=1 // loop_exit
      _
    %784 = vsyncpa [#allocation3], 1
    %s785 = scalar_lea.sflag [#allocation3], 1
    %786 = vsyncpa %s785, 1
    %787 = vsyncpa [#allocation6], 1
    %788 = vsyncpa [#allocation4], 1
    %s789 = scalar_lea.sflag [#allocation4], 1
    %790 = vsyncpa %s789, 1

</llo_original>
